<compile_context>
chip_gen: v5e
topology: v5e:2x2
jax: 0.10.0
libtpu: 0.0.40
codegen_flags: <defaults>
</compile_context>

<pallas_src>
import jax
import jax.numpy as jnp
from jax.experimental import pallas as pl
from jax.experimental.pallas import tpu as pltpu


def fused_kernel(x_ref, p_ref, o_ref):
    # x_ref: SMEM f32[4]  = x1[0].reshape(-1)   -> x_ref[k*2 + i] = x1[0, k, i]
    # p_ref: SMEM f32[6]  = [w00, w01, w10, w11, b0, b1]   (packed at init)
    # o_ref: SMEM f32[2]  = flattened (1, 2) model output
    x00 = x_ref[0]  # x1[0, 0, 0]
    x01 = x_ref[1]  # x1[0, 0, 1]
    x10 = x_ref[2]  # x1[0, 1, 0]
    x11 = x_ref[3]  # x1[0, 1, 1]

    w00 = p_ref[0]
    w01 = p_ref[1]
    w10 = p_ref[2]
    w11 = p_ref[3]
    b0 = p_ref[4]
    b1 = p_ref[5]

    # linear(v1)[0, i, j] = sum_k v1[0,i,k] * W[j,k] + b[j],  v1[0,i,k] = x1[0,k,i]
    #   => v2[0, i, j] = W[j,0]*x1[0,0,i] + W[j,1]*x1[0,1,i] + b[j]
    r00 = jnp.maximum(w00 * x00 + w01 * x10 + b0, 0.0)   # relu(v2[0,0,0])
    r01 = jnp.maximum(w10 * x00 + w11 * x10 + b1, 0.0)   # relu(v2[0,0,1])
    r10 = jnp.maximum(w00 * x01 + w01 * x11 + b0, 0.0)   # relu(v2[0,1,0])
    r11 = jnp.maximum(w10 * x01 + w11 * x11 + b1, 0.0)   # relu(v2[0,1,1])

    # avg_pool1d(k=3, s=3, pad=1, count_include_pad=True) over the row-major
    # flattening [r00, r01, r10, r11] (padded [0,r00,r01 | r10,r11,0]):
    #   out[0] = (r00 + r01) / 3,   out[1] = (r10 + r11) / 3
    # Final relu is a provable no-op (sum of relus >= 0) -> omitted.
    third = 1.0 / 3.0
    o_ref[0] = (r00 + r01) * third
    o_ref[1] = (r10 + r11) * third


def pack_params(weight, bias):
    """Done once at parameter-init time: one flat (6,) operand (one DMA)."""
    assert weight.shape == (2, 2) and bias.shape == (2,)
    return jnp.concatenate(
        [weight.reshape(-1), bias]).astype(jnp.float32)


def model_forward(x1, params):
    """x1: (1,2,2) f32, params: (6,) f32 packed [W.flatten(), b] -> (1,2) f32."""
    assert x1.shape == (1, 2, 2), x1.shape     # hard-coded Linear(2, 2) sizes
    assert params.shape == (6,), params.shape
    out_flat = pl.pallas_call(
        fused_kernel,
        out_shape=jax.ShapeDtypeStruct((2,), jnp.float32),
        in_specs=[
            pl.BlockSpec(memory_space=pltpu.MemorySpace.SMEM),
            pl.BlockSpec(memory_space=pltpu.MemorySpace.SMEM),
        ],
        out_specs=pl.BlockSpec(memory_space=pltpu.MemorySpace.SMEM),
    )(x1.reshape(-1).astype(jnp.float32), params)
    return out_flat.reshape(1, 2)


def reference_forward(x1, weight, bias):
    """Pure-JAX reference with the same avg_pool1d interpretation."""
    v1 = jnp.transpose(x1, (0, 2, 1))                 # (1, 2, 2)
    v2 = v1 @ weight.T + bias                         # linear
    x2 = jax.nn.relu(v2)
    v3 = x2.reshape(1, 4)
    padded = jnp.pad(v3, ((0, 0), (1, 1)))            # pad=1 each side
    v4 = (padded.reshape(1, 2, 3)).mean(axis=-1)      # k=3, s=3, count_include_pad
    v6 = jax.nn.relu(v4)
    return v6.reshape(1, 2)


if __name__ == "__main__":
    key = jax.random.PRNGKey(0)
    kx, kw, kb = jax.random.split(key, 3)

    # input: (1, 2, 2) like torch.randn(1, 2, 2)
    x1 = jax.random.normal(kx, (1, 2, 2), dtype=jnp.float32)

    # nn.Linear(2, 2) parameters: uniform(-1/sqrt(in), 1/sqrt(in))
    bound = 1.0 / (2.0 ** 0.5)
    weight = jax.random.uniform(kw, (2, 2), jnp.float32, -bound, bound)
    bias = jax.random.uniform(kb, (2,), jnp.float32, -bound, bound)
    params = pack_params(weight, bias)     # done once at init time

    out = jax.block_until_ready(model_forward(x1, params))

    ref = reference_forward(x1, weight, bias)
    assert out.shape == (1, 2), out.shape
    # sum*(1/3) vs mean() may differ by <=1 ulp; tolerance covers it.
    assert jnp.allclose(out, ref, atol=1e-5, rtol=1e-5), (out, ref)

    print("KERNEL_OK")
</pallas_src>

<mosaic_0001>
module attributes {stable_mosaic.version = 11 : i64} {
  func.func @fused_kernel(%arg0: memref<4xf32, #tpu.memory_space<smem>>, %arg1: memref<6xf32, #tpu.memory_space<smem>>, %arg2: memref<2xf32, #tpu.memory_space<smem>>) attributes {dimension_semantics = [], scalar_prefetch = 0 : i64, scratch_operands = 0 : i64, tpu.core_type = #tpu.core_type<tc>} {
    %c0 = arith.constant 0 : index
    %0 = memref.load %arg0[%c0] : memref<4xf32, #tpu.memory_space<smem>>
    %c1 = arith.constant 1 : index
    %1 = memref.load %arg0[%c1] : memref<4xf32, #tpu.memory_space<smem>>
    %c2 = arith.constant 2 : index
    %2 = memref.load %arg0[%c2] : memref<4xf32, #tpu.memory_space<smem>>
    %c3 = arith.constant 3 : index
    %3 = memref.load %arg0[%c3] : memref<4xf32, #tpu.memory_space<smem>>
    %c0_0 = arith.constant 0 : index
    %4 = memref.load %arg1[%c0_0] : memref<6xf32, #tpu.memory_space<smem>>
    %c1_1 = arith.constant 1 : index
    %5 = memref.load %arg1[%c1_1] : memref<6xf32, #tpu.memory_space<smem>>
    %c2_2 = arith.constant 2 : index
    %6 = memref.load %arg1[%c2_2] : memref<6xf32, #tpu.memory_space<smem>>
    %c3_3 = arith.constant 3 : index
    %7 = memref.load %arg1[%c3_3] : memref<6xf32, #tpu.memory_space<smem>>
    %c4 = arith.constant 4 : index
    %8 = memref.load %arg1[%c4] : memref<6xf32, #tpu.memory_space<smem>>
    %c5 = arith.constant 5 : index
    %9 = memref.load %arg1[%c5] : memref<6xf32, #tpu.memory_space<smem>>
    %10 = arith.mulf %4, %0 : f32
    %11 = arith.mulf %5, %2 : f32
    %12 = arith.addf %10, %11 : f32
    %13 = arith.addf %12, %8 : f32
    %cst = arith.constant 0.000000e+00 : f32
    %14 = arith.maximumf %13, %cst : f32
    %15 = arith.mulf %6, %0 : f32
    %16 = arith.mulf %7, %2 : f32
    %17 = arith.addf %15, %16 : f32
    %18 = arith.addf %17, %9 : f32
    %cst_4 = arith.constant 0.000000e+00 : f32
    %19 = arith.maximumf %18, %cst_4 : f32
    %20 = arith.mulf %4, %1 : f32
    %21 = arith.mulf %5, %3 : f32
    %22 = arith.addf %20, %21 : f32
    %23 = arith.addf %22, %8 : f32
    %cst_5 = arith.constant 0.000000e+00 : f32
    %24 = arith.maximumf %23, %cst_5 : f32
    %25 = arith.mulf %6, %1 : f32
    %26 = arith.mulf %7, %3 : f32
    %27 = arith.addf %25, %26 : f32
    %28 = arith.addf %27, %9 : f32
    %cst_6 = arith.constant 0.000000e+00 : f32
    %29 = arith.maximumf %28, %cst_6 : f32
    %30 = arith.addf %14, %19 : f32
    %cst_7 = arith.constant 0.333333343 : f32
    %31 = arith.mulf %30, %cst_7 : f32
    %c0_8 = arith.constant 0 : index
    %32 = memref.load %arg2[%c0_8] : memref<2xf32, #tpu.memory_space<smem>>
    memref.store %31, %arg2[%c0_8] : memref<2xf32, #tpu.memory_space<smem>>
    %33 = arith.addf %24, %29 : f32
    %cst_9 = arith.constant 0.333333343 : f32
    %34 = arith.mulf %33, %cst_9 : f32
    %c1_10 = arith.constant 1 : index
    %35 = memref.load %arg2[%c1_10] : memref<2xf32, #tpu.memory_space<smem>>
    memref.store %34, %arg2[%c1_10] : memref<2xf32, #tpu.memory_space<smem>>
    return
  }
}

</mosaic_0001>

<llo_original>
// kernel: tpu_custom_call.1
$region0: #{tpu_custom_call.1}
  #allocation0 [shape = 'u32[]', space=smem, size = 0x4, offset = 0x4, fixed_abs, tag = 'smem constant byte address 0x4 - core index']
  #allocation1 [shape = 'u32[72,128]{1,0:T(1,128)}', space=vmem, size = 0x9000, scoped, tag = 'internal scratch']
  %s0 = inlined_call_operand.hbm [shape: f32[4], index: 0, kind: input, shape index: {}]
  %s1 = inlined_call_operand.hbm [shape: f32[6], index: 1, kind: input, shape index: {}]
  %s2 = inlined_call_operand.hbm [shape: f32[2], index: 2, kind: output, shape index: {}]
  %s3 = sld [smem:[#allocation0]]
  $region26: #{tpu_custom_call.1} parent=0
    _
  %s5 = ssub.s32 1, %s3
  %s6 = scalar_select 0, %s5, %s3
  $region1: #{tpu_custom_call.1} parent=0
    #allocation2 [shape = 'u8[512]{0}', space=smem, size = 0x200, scoped, tag = 'input window, operand 0, single buffered']
    #allocation3 [shape = 's32[1]{0}', space=sflag, size = 0x4, scoped, tag = 'scoped memory for tpu_custom_call.1']
    #allocation4 [shape = 's32[1]{0}', space=sflag, size = 0x4, scoped, tag = 'scoped memory for tpu_custom_call.1']
    #allocation5 [shape = 'u8[512]{0}', space=smem, size = 0x200, scoped, tag = 'input window, operand 1, single buffered']
    #allocation6 [shape = 's32[1]{0}', space=sflag, size = 0x4, scoped, tag = 'scoped memory for tpu_custom_call.1']
    #allocation7 [shape = 'u8[512]{0}', space=smem, size = 0x200, scoped, tag = 'output window, operand 0, single buffered']
    %7 = vsyncpa [#allocation3], 0
    %8 = vsyncpa [#allocation6], 0
    %9 = vsyncpa [#allocation4], 0
    // Predicated region
    $region2: #{tpu_custom_call.1} parent=1 // pred_check
      _
    $region3: #{tpu_custom_call.1} parent=1 // pred_check_branch
      %11 = sbr.rel (0) target = $region5
    $region4: #{tpu_custom_call.1} parent=1 // pred_region
      %13 = vsyncadd [#allocation3], 0
      %s15 = sshll.u32 %s0, 4
      %s16 = int_to_ptr.hbm [resolvable:$true] %s15
      %18 = dma.hbm_to_smem %s16, 16, [#allocation2], [#allocation3]
    $region5: #{tpu_custom_call.1} parent=1 // pred_fallthru
      _
    // Predicated region
    $region6: #{tpu_custom_call.1} parent=1 // pred_check
      _
    $region7: #{tpu_custom_call.1} parent=1 // pred_check_branch
      %20 = sbr.rel (0) target = $region9
    $region8: #{tpu_custom_call.1} parent=1 // pred_region
      %22 = vsyncadd [#allocation6], 0
      %s24 = sshll.u32 %s1, 4
      %s25 = int_to_ptr.hbm [resolvable:$true] %s24
      %27 = dma.hbm_to_smem %s25, 16, [#allocation5], [#allocation6]
    $region9: #{tpu_custom_call.1} parent=1 // pred_fallthru
      _
    // Predicated region
    $region10: #{tpu_custom_call.1} parent=1 // pred_check
      _
    $region11: #{tpu_custom_call.1} parent=1 // pred_check_branch
      %29 = sbr.rel (0) target = $region13
    $region12: #{tpu_custom_call.1} parent=1 // pred_region
      %31 = dma.done [#allocation3], 16
    $region13: #{tpu_custom_call.1} parent=1 // pred_fallthru
      _
    // Predicated region
    $region14: #{tpu_custom_call.1} parent=1 // pred_check
      _
    $region15: #{tpu_custom_call.1} parent=1 // pred_check_branch
      %33 = sbr.rel (0) target = $region17
    $region16: #{tpu_custom_call.1} parent=1 // pred_region
      %35 = dma.done [#allocation6], 16
    $region17: #{tpu_custom_call.1} parent=1 // pred_fallthru
      _
    %36 = sfence
    %s37 = sld [smem:[#allocation2]]
    %s38 = sld [smem:[#allocation2 + $0x1]]
    %s39 = sld [smem:[#allocation2 + $0x2]]
    %s40 = sld [smem:[#allocation2 + $0x3]]
    %s41 = sld [smem:[#allocation5]]
    %s42 = sld [smem:[#allocation5 + $0x1]]
    %s43 = sld [smem:[#allocation5 + $0x2]]
    %s44 = sld [smem:[#allocation5 + $0x3]]
    %s45 = sld [smem:[#allocation5 + $0x4]]
    %s46 = sld [smem:[#allocation5 + $0x5]]
    %s47 = smul.f32 %s41, %s37
    %s48 = smul.f32 %s42, %s39
    %s49 = sadd.f32 %s47, %s48
    %s50 = sadd.f32 %s49, %s45
    %s51 = smax.f32 %s50, 0.0
    %s52 = smul.f32 %s43, %s37
    %s53 = smul.f32 %s44, %s39
    %s54 = sadd.f32 %s52, %s53
    %s55 = sadd.f32 %s54, %s46
    %s56 = smax.f32 %s55, 0.0
    %s57 = smul.f32 %s41, %s38
    %s58 = smul.f32 %s42, %s40
    %s59 = sadd.f32 %s57, %s58
    %s60 = sadd.f32 %s59, %s45
    %s61 = smax.f32 %s60, 0.0
    %s62 = smul.f32 %s43, %s38
    %s63 = smul.f32 %s44, %s40
    %s64 = sadd.f32 %s62, %s63
    %s65 = sadd.f32 %s64, %s46
    %s66 = smax.f32 %s65, 0.0
    %s67 = sadd.f32 %s51, %s56
    %s68 = smul.f32 %s67, 0.33333334
    %s69 = scalar_lea.smem [#allocation7], 0
    %70 = sst [smem:[%s69]] %s68
    %s71 = sadd.f32 %s61, %s66
    %s72 = smul.f32 %s71, 0.33333334
    %s73 = scalar_lea.smem [#allocation7], 1
    %74 = sst [smem:[%s73]] %s72
    // Predicated region
    $region18: #{tpu_custom_call.1} parent=1 // pred_check
      _
    $region19: #{tpu_custom_call.1} parent=1 // pred_check_branch
      %76 = sbr.rel (0) target = $region21
    $region20: #{tpu_custom_call.1} parent=1 // pred_region
      %78 = vsyncadd [#allocation4], 0
      %s80 = sshll.u32 %s2, 4
      %s81 = int_to_ptr.hbm [resolvable:$true] %s80
      %83 = dma.smem_to_hbm [#allocation7], 16, %s81, [#allocation4]
    $region21: #{tpu_custom_call.1} parent=1 // pred_fallthru
      _
    // Predicated region
    $region22: #{tpu_custom_call.1} parent=1 // pred_check
      _
    $region23: #{tpu_custom_call.1} parent=1 // pred_check_branch
      %85 = sbr.rel (0) target = $region25
    $region24: #{tpu_custom_call.1} parent=1 // pred_region
      %87 = dma.done [#allocation4], 16
    $region25: #{tpu_custom_call.1} parent=1 // pred_fallthru
      _
    %88 = sfence
    %89 = vsyncpa [#allocation3], 1
    %90 = vsyncpa [#allocation6], 1
    %91 = vsyncpa [#allocation4], 1

</llo_original>
